<compile_context>
chip_gen: v6e
topology: v6e:2x2x1
jax: 0.10.0
libtpu: 0.0.40
codegen_flags: <defaults>
</compile_context>

<pallas_src>
import jax
import jax.numpy as jnp
from jax.experimental import pallas as pl
from jax.experimental.pallas import tpu as pltpu


def _gelu2_kernel(x_ref, o_ref):
    x = x_ref[...]
    # x * sigmoid(1.702*x) == x * 0.5 * (1 + tanh(0.851*x))  (single EUP op)
    o_ref[...] = (x * (0.5 * (jnp.tanh(0.851 * x) + 1.0))).astype(o_ref.dtype)


def _choose_lanes(n):
    """Widest 128-multiple lane width that divides n (else 128 + tiny pad)."""
    for lanes in (2048, 1024, 512, 256, 128):
        if n % lanes == 0:
            return lanes, 0
    lanes = 128
    return lanes, (-n) % lanes


def gelu2(x, *, target_block_bytes=2 * 1024 * 1024):
    """Apply GELU2 elementwise to an arbitrarily-shaped array."""
    orig_shape = x.shape
    orig_dtype = x.dtype
    n = x.size
    itemsize = jnp.dtype(orig_dtype).itemsize

    lanes, pad = _choose_lanes(n)

    x_flat = jnp.ravel(x)
    if pad:
        x_flat = jnp.pad(x_flat, (0, pad))  # tiny (< 128 elem) copy, rare path
    n_padded = n + pad
    rows = n_padded // lanes
    x2d = x_flat.reshape(rows, lanes)

    # ~2 MiB per block (multiple of 8 rows); whole array if it's smaller.
    target_rows = max(8, ((target_block_bytes // (lanes * itemsize)) // 8) * 8)
    tile_rows = rows if rows <= target_rows else target_rows
    grid = (pl.cdiv(rows, tile_rows),)

    cost = pl.CostEstimate(
        flops=4 * n_padded,
        transcendentals=n_padded,
        bytes_accessed=2 * n_padded * itemsize,
    )

    out2d = pl.pallas_call(
        _gelu2_kernel,
        out_shape=jax.ShapeDtypeStruct((rows, lanes), orig_dtype),
        grid_spec=pltpu.PrefetchScalarGridSpec(
            num_scalar_prefetch=0,
            grid=grid,
            in_specs=[pl.BlockSpec((tile_rows, lanes), lambda i: (i, 0))],
            out_specs=pl.BlockSpec((tile_rows, lanes), lambda i: (i, 0)),
        ),
        compiler_params=pltpu.CompilerParams(
            dimension_semantics=("parallel",)),
        cost_estimate=cost,
    )(x2d)

    if pad:
        return out2d.reshape(-1)[:n].reshape(orig_shape)
    return out2d.reshape(orig_shape)


def gelu2_ref(x):
    return x * jax.nn.sigmoid(1.702 * x)


if __name__ == "__main__":
    key = jax.random.PRNGKey(0)

    # Shape consistent with typical NCHW usage of the module.
    x = jax.random.normal(key, (2, 4, 16, 16), dtype=jnp.float32)
    out = gelu2(x)
    jax.block_until_ready(out)
    ref = gelu2_ref(x)
    assert out.shape == x.shape and out.dtype == x.dtype
    assert jnp.allclose(out, ref, atol=1e-5, rtol=1e-5)

    # Exercise the ragged (non-128-multiple) padding path too.
    x2 = jax.random.normal(jax.random.PRNGKey(1), (3, 5, 7, 11),
                           dtype=jnp.float32)
    out2 = gelu2(x2)
    jax.block_until_ready(out2)
    assert out2.shape == x2.shape and out2.dtype == x2.dtype
    assert jnp.allclose(out2, gelu2_ref(x2), atol=1e-5, rtol=1e-5)

    print("KERNEL_OK")
</pallas_src>

<mosaic_0001>
module attributes {stable_mosaic.version = 11 : i64} {
  func.func @_gelu2_kernel(%arg0: i32, %arg1: memref<1x2048xf32, #tpu.memory_space<vmem>>, %arg2: memref<1x2048xf32, #tpu.memory_space<vmem>>) attributes {dimension_semantics = [#tpu.dimension_semantics<parallel>], iteration_bounds = array<i64: 1>, scalar_prefetch = 0 : i64, scratch_operands = 0 : i64, tpu.core_type = #tpu.core_type<tc>, window_params = [{transform_indices = @transform_0, window_bounds = array<i64: 1, 2048>}, {transform_indices = @transform_1, window_bounds = array<i64: 1, 2048>}]} {
    %c0 = arith.constant 0 : index
    %c0_0 = arith.constant 0 : index
    %0 = vector.load %arg1[%c0, %c0_0] : memref<1x2048xf32, #tpu.memory_space<vmem>>, vector<1x2048xf32>
    %cst = arith.constant 8.510000e-01 : f32
    %1 = vector.broadcast %cst : f32 to vector<1x2048xf32>
    %2 = arith.mulf %1, %0 : vector<1x2048xf32>
    %3 = math.tanh %2 : vector<1x2048xf32>
    %cst_1 = arith.constant 1.000000e+00 : f32
    %4 = vector.broadcast %cst_1 : f32 to vector<1x2048xf32>
    %5 = arith.addf %3, %4 : vector<1x2048xf32>
    %cst_2 = arith.constant 5.000000e-01 : f32
    %6 = vector.broadcast %cst_2 : f32 to vector<1x2048xf32>
    %7 = arith.mulf %6, %5 : vector<1x2048xf32>
    %8 = arith.mulf %0, %7 : vector<1x2048xf32>
    %c0_3 = arith.constant 0 : index
    %c0_4 = arith.constant 0 : index
    %9 = vector.load %arg2[%c0_3, %c0_4] : memref<1x2048xf32, #tpu.memory_space<vmem>>, vector<1x2048xf32>
    tpu.vector_store %arg2[%c0_3, %c0_4], %8 {strides = array<i32>} : memref<1x2048xf32, #tpu.memory_space<vmem>>, vector<1x2048xf32>,
    return
  }
  func.func @transform_0(%arg0: i32) -> (i32, i32) {
    %c0_i32 = arith.constant 0 : i32
    %c0_i32_0 = arith.constant 0 : i32
    return %arg0, %c0_i32 : i32, i32
  }
  func.func @transform_1(%arg0: i32) -> (i32, i32) {
    %c0_i32 = arith.constant 0 : i32
    %c0_i32_0 = arith.constant 0 : i32
    return %arg0, %c0_i32 : i32, i32
  }
}

</mosaic_0001>

<llo_original>
// kernel: tpu_custom_call.1
$region0: #{tpu_custom_call.1}
  #allocation0 [shape = 'u32[]', space=smem, size = 0x4, offset = 0x4, fixed_abs, tag = 'smem constant byte address 0x4 - core index']
  #allocation1 [shape = 'u32[144,128]{1,0:T(1,128)}', space=vmem, size = 0x12000, scoped, tag = 'internal scratch']
  %s0 = inlined_call_operand.hbm [shape: f32[1,2048], index: 0, kind: input, shape index: {}]
  %s1 = inlined_call_operand.hbm [shape: f32[1,2048], index: 1, kind: output, shape index: {}]
  %s2 = sld [smem:[#allocation0]]
  $region18: #{tpu_custom_call.1} parent=0
    _
  %s4 = ssub.s32 1, %s2
  %s5 = scalar_select 0, %s4, %s2
  $region1: #{tpu_custom_call.1} parent=0
    #allocation2 [shape = 'u8[8192]{0}', space=vmem, size = 0x2000, scoped, tag = 'input window, operand 0, single buffered']
    #allocation3 [shape = 's32[1]{0}', space=sflag, size = 0x4, scoped, tag = 'scoped memory for tpu_custom_call.1']
    #allocation4 [shape = 's32[1]{0}', space=sflag, size = 0x4, scoped, tag = 'scoped memory for tpu_custom_call.1']
    #allocation5 [shape = 'u8[8192]{0}', space=vmem, size = 0x2000, scoped, tag = 'output window, operand 0, single buffered']
    %6 = vsyncpa [#allocation3], 0
    %7 = vsyncpa [#allocation4], 0
    // Predicated region
    $region2: #{tpu_custom_call.1} parent=1 // pred_check
      _
    $region3: #{tpu_custom_call.1} parent=1 // pred_check_branch
      %9 = sbr.rel (0) target = $region5
    $region4: #{tpu_custom_call.1} parent=1 // pred_region
      %s11 = ssub.s32 256, 256
      %12 = vsyncadd [#allocation3], %s11
      %s14 = sshll.u32 [#allocation2], 4
      %s15 = int_to_ptr.vmem [resolvable:$true] %s14
      %17 = dma.hbm_to_vmem [thread:$0]  %s0, 256, %s15, [#allocation3]
    $region5: #{tpu_custom_call.1} parent=1 // pred_fallthru
      _
    // Predicated region
    $region6: #{tpu_custom_call.1} parent=1 // pred_check
      _
    $region7: #{tpu_custom_call.1} parent=1 // pred_check_branch
      %19 = sbr.rel (0) target = $region9
    $region8: #{tpu_custom_call.1} parent=1 // pred_region
      %20 = dma.done [#allocation3], 256
    $region9: #{tpu_custom_call.1} parent=1 // pred_fallthru
      _
    %v21 = vld [vmem:[#allocation2] sm:$0xff]
    %v22 = vld [vmem:[#allocation2 + $0x8] sm:$0xff]
    %v23 = vmul.f32 %v21, 0.851
    %v24 = vmul.f32 %v22, 0.851
    %v25 = vtanh.pop %v23
    %v26 = vtanh.pop %v24
    %v27 = vadd.f32 %v25, 1.0
    %v28 = vadd.f32 %v26, 1.0
    %v29 = vmul.f32 %v27, 0.5
    %v30 = vmul.f32 %v28, 0.5
    %v31 = vmul.f32 %v21, %v29
    %v32 = vmul.f32 %v22, %v30
    %33 = vst [vmem:[#allocation5] sm:$0xff] %v31
    %34 = vst [vmem:[#allocation5 + $0x8] sm:$0xff] %v32
    // Predicated region
    $region10: #{tpu_custom_call.1} parent=1 // pred_check
      _
    $region11: #{tpu_custom_call.1} parent=1 // pred_check_branch
      %36 = sbr.rel (0) target = $region13
    $region12: #{tpu_custom_call.1} parent=1 // pred_region
      %s38 = ssub.s32 256, 256
      %39 = vsyncadd [#allocation4], %s38
      %s41 = sshll.u32 [#allocation5], 4
      %s42 = int_to_ptr.vmem [resolvable:$true] %s41
      %44 = dma.vmem_to_hbm [thread:$0]  %s42, 256, %s1, [#allocation4]
    $region13: #{tpu_custom_call.1} parent=1 // pred_fallthru
      _
    // Predicated region
    $region14: #{tpu_custom_call.1} parent=1 // pred_check
      _
    $region15: #{tpu_custom_call.1} parent=1 // pred_check_branch
      %46 = sbr.rel (0) target = $region17
    $region16: #{tpu_custom_call.1} parent=1 // pred_region
      %47 = dma.done [#allocation4], 256
    $region17: #{tpu_custom_call.1} parent=1 // pred_fallthru
      _
    %48 = vsyncpa [#allocation3], 1
    %49 = vsyncpa [#allocation4], 1

</llo_original>
